<compile_context>
chip_gen: v7x
topology: tpu7x:2x2x1
jax: 0.10.0
libtpu: 0.0.40
codegen_flags: <defaults>
</compile_context>

<pallas_src>
import math
from typing import NamedTuple, Optional

import jax
import jax.numpy as jnp
from jax.experimental import pallas as pl
from jax.experimental.pallas import tpu as pltpu


_INV_SQRT2 = 1.0 / math.sqrt(2.0)
_SQRT_2_OVER_PI = math.sqrt(2.0 / math.pi)


def _gelu_erf(x):
    # torch.nn.GELU() default: exact erf GELU (f32).
    return 0.5 * x * (1.0 + jax.lax.erf(x * _INV_SQRT2))


def _gelu_tanh(x):
    # tanh approximation: transcendental goes to the EUP slot instead of a
    # long VALU polynomial chain.
    return 0.5 * x * (1.0 + jnp.tanh(_SQRT_2_OVER_PI * (x + 0.044715 * x * x * x)))


def _round_up(a, b):
    return ((a + b - 1) // b) * b


def _default_tile_m():
    """Per-generation row-tile default (rows of weight reuse needed to be MXU-bound)."""
    try:
        kind = jax.devices()[0].device_kind.lower()
    except Exception:
        return 768
    if "v5 lite" in kind or "v5lite" in kind or "v5e" in kind:
        return 512          # v5e roofline ~240 rows; 512 gives margin (x128 MXU)
    if "v7" in kind:
        return 512          # v7x roofline ~310 rows/core; "parallel" axis feeds 2 TCs
    return 768              # v6e roofline ~680 rows


class MlpParams(NamedTuple):
    w1: jax.Array          # (D, H_pad)      bf16
    b1: jax.Array          # (1, H_pad)      f32
    w2: jax.Array          # (H_pad, Do_pad) bf16
    b2: jax.Array          # (1, Do_pad)     f32
    out_features: int
    tile_h: int


def prepare_mlp_params(w1, b1, w2, b2, *, tile_h: Optional[int] = None) -> MlpParams:
    """Pad/cast the (static) weights once, outside the per-call hot path."""
    D, H = w1.shape
    Do = w2.shape[1]
    if tile_h is None:
        tile_h = 1024
    tile_h = min(_round_up(int(tile_h), 128), _round_up(H, 128))   # multiple of 128
    H_pad = _round_up(H, tile_h)
    Do_pad = _round_up(Do, 128)                                    # lane-dense output

    w1p = w1 if H_pad == H else jnp.pad(w1, ((0, 0), (0, H_pad - H)))
    w1p = w1p.astype(jnp.bfloat16)
    b1p = jnp.pad(b1, (0, H_pad - H)).reshape(1, H_pad).astype(jnp.float32)
    # Padded hidden rows of w2 are zero, so padded hidden columns contribute 0
    # (GELU(0 + 0) = 0 anyway).
    w2p = jnp.pad(w2, ((0, H_pad - H), (0, Do_pad - Do))).astype(jnp.bfloat16)
    b2p = jnp.pad(b2, (0, Do_pad - Do)).reshape(1, Do_pad).astype(jnp.float32)
    return MlpParams(w1p, b1p, w2p, b2p, Do, tile_h)


def _make_mlp_kernel(gelu_fn, use_acc_scratch):
    """Grid = (row tiles, hidden chunks); the hidden axis is the reduction axis.

    x_ref : (tile_m, D)      bf16
    w1_ref: (D, tile_h)      bf16
    b1_ref: (1, tile_h)      f32
    w2_ref: (tile_h, Do_pad) bf16
    b2_ref: (1, Do_pad)      f32
    o_ref : (tile_m, Do_pad) out dtype (resident across the hidden axis)
    """
    if use_acc_scratch:
        def kernel(x_ref, w1_ref, b1_ref, w2_ref, b2_ref, o_ref, acc_ref):
            k = pl.program_id(1)

            @pl.when(k == 0)
            def _init():
                # Fold the fc2 bias into the accumulator init.
                acc_ref[...] = jnp.broadcast_to(b2_ref[...], acc_ref.shape)

            h = jnp.dot(x_ref[...], w1_ref[...],
                        preferred_element_type=jnp.float32)
            h = gelu_fn(h + b1_ref[...])
            acc_ref[...] += jnp.dot(h.astype(jnp.bfloat16), w2_ref[...],
                                    preferred_element_type=jnp.float32)

            @pl.when(k == pl.num_programs(1) - 1)
            def _finalize():
                o_ref[...] = acc_ref[...].astype(o_ref.dtype)

        return kernel

    def kernel(x_ref, w1_ref, b1_ref, w2_ref, b2_ref, o_ref):
        # Output is f32: accumulate directly into the resident output tile.
        k = pl.program_id(1)

        @pl.when(k == 0)
        def _init():
            o_ref[...] = jnp.broadcast_to(b2_ref[...], o_ref.shape)

        h = jnp.dot(x_ref[...], w1_ref[...],
                    preferred_element_type=jnp.float32)
        h = gelu_fn(h + b1_ref[...])
        o_ref[...] += jnp.dot(h.astype(jnp.bfloat16), w2_ref[...],
                              preferred_element_type=jnp.float32)

    return kernel


def mlp_forward(x, params: MlpParams, *, tile_m: Optional[int] = None,
                approx_gelu: bool = True):
    """ViT Mlp forward.  x: (B, N, D); params: prepared via prepare_mlp_params."""
    B, N, D = x.shape
    assert params.w1.shape[0] == D, "in_features mismatch"
    M = B * N
    out_dtype = x.dtype

    Do = params.out_features
    H_pad = params.w1.shape[1]
    Do_pad = params.w2.shape[1]
    tile_h = params.tile_h

    # ---- row tile selection ----
    if tile_m is None:
        tile_m = _default_tile_m()
    # Clamp to M (single tile for small batches -> weights streamed only once)
    # and force a multiple of 16 for bf16 sublane packing.
    tile_m = _round_up(max(16, min(int(tile_m), M)), 16)
    M_pad = _round_up(M, tile_m)

    # ---- x: cast/pad only when needed (avoid extra HBM passes) ----
    x2 = x.reshape(M, D)
    if x2.dtype != jnp.bfloat16:
        x2 = x2.astype(jnp.bfloat16)
    if M_pad != M:
        x2 = jnp.pad(x2, ((0, M_pad - M), (0, 0)))

    grid = (M_pad // tile_m, H_pad // tile_h)
    n_row_tiles = grid[0]

    gelu_fn = _gelu_tanh if approx_gelu else _gelu_erf
    use_acc = out_dtype != jnp.float32
    kernel = _make_mlp_kernel(gelu_fn, use_acc)
    scratch = [pltpu.VMEM((tile_m, Do_pad), jnp.float32)] if use_acc else []

    # Weights are re-streamed once per row tile: reflect that in bytes_accessed.
    cost = pl.CostEstimate(
        flops=2 * M_pad * (D * H_pad + H_pad * Do_pad),
        transcendentals=M_pad * H_pad,
        bytes_accessed=(x2.size * 2
                        + n_row_tiles * (params.w1.size * 2 + params.w2.size * 2
                                         + params.b1.size * 4 + params.b2.size * 4)
                        + M_pad * Do_pad * jnp.dtype(out_dtype).itemsize),
    )

    out = pl.pallas_call(
        kernel,
        out_shape=jax.ShapeDtypeStruct((M_pad, Do_pad), out_dtype),
        grid_spec=pltpu.PrefetchScalarGridSpec(
            num_scalar_prefetch=0,
            grid=grid,
            in_specs=[
                pl.BlockSpec((tile_m, D),      lambda i, k: (i, 0)),  # x row tile
                pl.BlockSpec((D, tile_h),      lambda i, k: (0, k)),  # w1 H-chunk
                pl.BlockSpec((1, tile_h),      lambda i, k: (0, k)),  # b1 H-chunk
                pl.BlockSpec((tile_h, Do_pad), lambda i, k: (k, 0)),  # w2 H-chunk
                pl.BlockSpec((1, Do_pad),      lambda i, k: (0, 0)),  # b2
            ],
            out_specs=pl.BlockSpec((tile_m, Do_pad), lambda i, k: (i, 0)),
            scratch_shapes=scratch,
        ),
        compiler_params=pltpu.CompilerParams(
            dimension_semantics=("parallel", "arbitrary"),
            vmem_limit_bytes=48 * 1024 * 1024,   # headroom under v7x 64 MiB
        ),
        cost_estimate=cost,
    )(x2, params.w1, params.b1, params.w2, params.b2)

    # Drop row/column padding only if any was added.
    if M_pad != M or Do_pad != Do:
        out = out[:M, :Do]
    return out.reshape(B, N, Do)


def _torch_like_linear_init(key, fan_in, fan_out, dtype=jnp.float32):
    """Deterministic init mimicking nn.Linear defaults."""
    kw, kb = jax.random.split(key)
    bound = 1.0 / math.sqrt(fan_in)
    w = jax.random.uniform(kw, (fan_in, fan_out), dtype, -bound, bound)
    b = jax.random.uniform(kb, (fan_out,), dtype, -bound, bound)
    return w, b


if __name__ == "__main__":
    key = jax.random.PRNGKey(0)
    k_x, k_fc1, k_fc2 = jax.random.split(key, 3)

    # Small ViT-like shapes: batch=2, seq=8, in_features=32, hidden=64
    B, N, D, Hdim = 2, 8, 32, 64
    Do = D  # out_features defaults to in_features

    x = jax.random.normal(k_x, (B, N, D), jnp.float32)
    w1, b1 = _torch_like_linear_init(k_fc1, D, Hdim)
    w2, b2 = _torch_like_linear_init(k_fc2, Hdim, Do)

    # Pad/cast weights ONCE (hoisted out of the per-call hot path).
    params = prepare_mlp_params(w1, b1, w2, b2)

    # --- f32 output, tanh-approx GELU (default perf path; f32 direct-accumulate) ---
    y_approx = jax.block_until_ready(mlp_forward(x, params, approx_gelu=True))
    assert y_approx.shape == (B, N, Do)

    # --- f32 output, exact erf GELU (torch-exact activation path) ---
    y_exact = jax.block_until_ready(mlp_forward(x, params, approx_gelu=False))

    # --- bf16 output (exercises the acc-scratch kernel variant) ---
    y_bf16 = jax.block_until_ready(
        mlp_forward(x.astype(jnp.bfloat16), params, approx_gelu=True))

    # Reference helpers: mixed-precision mirrors the kernel numerics
    # (bf16 matmul inputs, f32 accumulation / activation).
    def mixed_ref(gelu_fn):
        xb = x.reshape(-1, D).astype(jnp.bfloat16).astype(jnp.float32)
        w1b = w1.astype(jnp.bfloat16).astype(jnp.float32)
        w2b = w2.astype(jnp.bfloat16).astype(jnp.float32)
        h = gelu_fn(xb @ w1b + b1).astype(jnp.bfloat16).astype(jnp.float32)
        return (h @ w2b + b2).reshape(B, N, Do)

    y_ref_tanh = mixed_ref(_gelu_tanh)
    y_ref_erf = mixed_ref(_gelu_erf)
    # Pure-f32 torch-equivalent reference (exact erf GELU).
    h32 = _gelu_erf(x.reshape(-1, D) @ w1 + b1)
    y_ref_f32 = (h32 @ w2 + b2).reshape(B, N, Do)

    assert jnp.allclose(y_approx, y_ref_tanh, atol=1e-2, rtol=1e-2), \
        "approx-GELU mismatch vs mixed ref"
    assert jnp.allclose(y_exact, y_ref_erf, atol=1e-2, rtol=1e-2), \
        "exact-GELU mismatch vs mixed ref"
    assert jnp.allclose(y_exact, y_ref_f32, atol=5e-2, rtol=5e-2), \
        "exact-GELU mismatch vs f32 torch-equivalent ref"
    assert jnp.allclose(y_approx, y_ref_f32, atol=5e-2, rtol=5e-2), \
        "approx-GELU mismatch vs f32 torch-equivalent ref"
    assert jnp.allclose(y_bf16.astype(jnp.float32), y_ref_tanh, atol=1e-1, rtol=1e-1), \
        "bf16-output mismatch vs mixed ref"

    print("KERNEL_OK")
</pallas_src>

<mosaic_0001>
module attributes {stable_mosaic.version = 11 : i64} {
  func.func @kernel(%arg0: i32, %arg1: i32, %arg2: memref<16x32xbf16, #tpu.memory_space<vmem>>, %arg3: memref<32x128xbf16, #tpu.memory_space<vmem>>, %arg4: memref<1x128xf32, #tpu.memory_space<vmem>>, %arg5: memref<128x128xbf16, #tpu.memory_space<vmem>>, %arg6: memref<1x128xf32, #tpu.memory_space<vmem>>, %arg7: memref<16x128xf32, #tpu.memory_space<vmem>>) attributes {dimension_semantics = [#tpu.dimension_semantics<parallel>, #tpu.dimension_semantics<arbitrary>], iteration_bounds = array<i64: 1, 1>, scalar_prefetch = 0 : i64, scratch_operands = 0 : i64, tpu.core_type = #tpu.core_type<tc>, window_params = [{transform_indices = @transform_0, window_bounds = array<i64: 16, 32>}, {transform_indices = @transform_1, window_bounds = array<i64: 32, 128>}, {transform_indices = @transform_2, window_bounds = array<i64: 1, 128>}, {transform_indices = @transform_3, window_bounds = array<i64: 128, 128>}, {pipeline_mode = #tpu.pipeline_mode<synchronous>, transform_indices = @transform_4, window_bounds = array<i64: 1, 128>}, {transform_indices = @transform_5, window_bounds = array<i64: 16, 128>}]} {
    %c0_i32 = arith.constant 0 : i32
    %0 = arith.cmpi eq, %arg1, %c0_i32 : i32
    %1 = arith.extui %0 : i1 to i32
    %c0_i32_0 = arith.constant 0 : i32
    %2 = arith.cmpi ne, %1, %c0_i32_0 : i32
    scf.if %2 {
      %c0_17 = arith.constant 0 : index
      %c0_18 = arith.constant 0 : index
      %28 = vector.load %arg6[%c0_17, %c0_18] : memref<1x128xf32, #tpu.memory_space<vmem>>, vector<1x128xf32>
      %29 = vector.shape_cast %28 : vector<1x128xf32> to vector<1x128xf32>
      %30 = vector.broadcast %29 : vector<1x128xf32> to vector<16x128xf32>
      %c0_19 = arith.constant 0 : index
      %c0_20 = arith.constant 0 : index
      %31 = vector.load %arg7[%c0_19, %c0_20] : memref<16x128xf32, #tpu.memory_space<vmem>>, vector<16x128xf32>
      tpu.vector_store %arg7[%c0_19, %c0_20], %30 {strides = array<i32>} : memref<16x128xf32, #tpu.memory_space<vmem>>, vector<16x128xf32>,
    } else {
    }
    %c0 = arith.constant 0 : index
    %c0_1 = arith.constant 0 : index
    %3 = vector.load %arg2[%c0, %c0_1] : memref<16x32xbf16, #tpu.memory_space<vmem>>, vector<16x32xbf16>
    %c0_2 = arith.constant 0 : index
    %c0_3 = arith.constant 0 : index
    %4 = vector.load %arg3[%c0_2, %c0_3] : memref<32x128xbf16, #tpu.memory_space<vmem>>, vector<32x128xbf16>
    %cst = arith.constant dense<0.000000e+00> : vector<16x128xf32>
    %5 = tpu.matmul %3, %4, %cst {dimension_numbers = #tpu.dot_dimension_numbers<[1], [0], [0], [1], [0, 0, 1, 1], [], []>} : vector<16x32xbf16>, vector<32x128xbf16>, vector<16x128xf32> -> vector<16x128xf32>
    %c0_4 = arith.constant 0 : index
    %c0_5 = arith.constant 0 : index
    %6 = vector.load %arg4[%c0_4, %c0_5] : memref<1x128xf32, #tpu.memory_space<vmem>>, vector<1x128xf32>
    %7 = vector.broadcast %6 : vector<1x128xf32> to vector<16x128xf32>
    %8 = arith.addf %5, %7 : vector<16x128xf32>
    %cst_6 = arith.constant 5.000000e-01 : f32
    %9 = vector.broadcast %cst_6 : f32 to vector<16x128xf32>
    %10 = arith.mulf %9, %8 : vector<16x128xf32>
    %cst_7 = arith.constant 4.471500e-02 : f32
    %11 = vector.broadcast %cst_7 : f32 to vector<16x128xf32>
    %12 = arith.mulf %11, %8 : vector<16x128xf32>
    %13 = arith.mulf %12, %8 : vector<16x128xf32>
    %14 = arith.mulf %13, %8 : vector<16x128xf32>
    %15 = arith.addf %8, %14 : vector<16x128xf32>
    %cst_8 = arith.constant 0.797884583 : f32
    %16 = vector.broadcast %cst_8 : f32 to vector<16x128xf32>
    %17 = arith.mulf %16, %15 : vector<16x128xf32>
    %18 = math.tanh %17 : vector<16x128xf32>
    %cst_9 = arith.constant 1.000000e+00 : f32
    %19 = vector.broadcast %cst_9 : f32 to vector<16x128xf32>
    %20 = arith.addf %19, %18 : vector<16x128xf32>
    %21 = arith.mulf %10, %20 : vector<16x128xf32>
    %c0_10 = arith.constant 0 : index
    %c0_11 = arith.constant 0 : index
    %22 = vector.load %arg7[%c0_10, %c0_11] : memref<16x128xf32, #tpu.memory_space<vmem>>, vector<16x128xf32>
    %23 = arith.truncf %21 : vector<16x128xf32> to vector<16x128xbf16>
    %c0_12 = arith.constant 0 : index
    %c0_13 = arith.constant 0 : index
    %24 = vector.load %arg5[%c0_12, %c0_13] : memref<128x128xbf16, #tpu.memory_space<vmem>>, vector<128x128xbf16>
    %cst_14 = arith.constant dense<0.000000e+00> : vector<16x128xf32>
    %25 = tpu.matmul %23, %24, %cst_14 {dimension_numbers = #tpu.dot_dimension_numbers<[1], [0], [0], [1], [0, 0, 1, 1], [], []>} : vector<16x128xbf16>, vector<128x128xbf16>, vector<16x128xf32> -> vector<16x128xf32>
    %26 = arith.addf %22, %25 : vector<16x128xf32>
    %c0_15 = arith.constant 0 : index
    %c0_16 = arith.constant 0 : index
    %27 = vector.load %arg7[%c0_15, %c0_16] : memref<16x128xf32, #tpu.memory_space<vmem>>, vector<16x128xf32>
    tpu.vector_store %arg7[%c0_15, %c0_16], %26 {strides = array<i32>} : memref<16x128xf32, #tpu.memory_space<vmem>>, vector<16x128xf32>,
    return
  }
  func.func @transform_0(%arg0: i32, %arg1: i32) -> (i32, i32) {
    %c0_i32 = arith.constant 0 : i32
    %c0_i32_0 = arith.constant 0 : i32
    return %arg0, %c0_i32 : i32, i32
  }
  func.func @transform_1(%arg0: i32, %arg1: i32) -> (i32, i32) {
    %c0_i32 = arith.constant 0 : i32
    %c0_i32_0 = arith.constant 0 : i32
    return %c0_i32, %arg1 : i32, i32
  }
  func.func @transform_2(%arg0: i32, %arg1: i32) -> (i32, i32) {
    %c0_i32 = arith.constant 0 : i32
    %c0_i32_0 = arith.constant 0 : i32
    return %c0_i32, %arg1 : i32, i32
  }
  func.func @transform_3(%arg0: i32, %arg1: i32) -> (i32, i32) {
    %c0_i32 = arith.constant 0 : i32
    %c0_i32_0 = arith.constant 0 : i32
    return %arg1, %c0_i32 : i32, i32
  }
  func.func @transform_4(%arg0: i32, %arg1: i32) -> (i32, i32) {
    %c0_i32 = arith.constant 0 : i32
    %c0_i32_0 = arith.constant 0 : i32
    %c0_i32_1 = arith.constant 0 : i32
    return %c0_i32, %c0_i32_0 : i32, i32
  }
  func.func @transform_5(%arg0: i32, %arg1: i32) -> (i32, i32) {
    %c0_i32 = arith.constant 0 : i32
    %c0_i32_0 = arith.constant 0 : i32
    return %arg0, %c0_i32 : i32, i32
  }
}

</mosaic_0001>

<llo_original>
// kernel: tpu_custom_call.1
$region0: #{tpu_custom_call.1}
  #allocation0 [shape = 'u32[]', space=smem, size = 0x4, offset = 0x4, fixed_abs, tag = 'smem constant byte address 0x4 - core index']
  #allocation1 [shape = 'u32[144,128]{1,0:T(1,128)}', space=vmem, size = 0x12000, scoped, tag = 'internal scratch']
  %s0 = inlined_call_operand.hbm [shape: bf16[16,32], index: 0, kind: input, shape index: {}]
  %s1 = inlined_call_operand.hbm [shape: bf16[32,128], index: 1, kind: input, shape index: {}]
  %s2 = inlined_call_operand.vmem [shape: f32[1,128], index: 2, kind: input, shape index: {}]
  %s3 = inlined_call_operand.hbm [shape: bf16[128,128], index: 3, kind: input, shape index: {}]
  %s4 = inlined_call_operand.vmem [shape: f32[1,128], index: 4, kind: input, shape index: {}]
  %s5 = inlined_call_operand.hbm [shape: f32[16,128], index: 5, kind: output, shape index: {}]
  %s6 = sld [smem:[#allocation0]]
  $region46: #{tpu_custom_call.1} parent=0
    _
  %s8 = ssub.s32 1, %s6
  %s9 = scalar_select 0, %s8, %s6
  $region1: #{tpu_custom_call.1} parent=0
    #allocation2 [shape = 'u8[4096]{0}', space=vmem, size = 0x1000, scoped, tag = 'input window, operand 0, single buffered']
    #allocation3 [shape = 's32[1]{0}', space=sflag, size = 0x4, scoped, tag = 'scoped memory for tpu_custom_call.1']
    #allocation4 [shape = 's32[1]{0}', space=sflag, size = 0x4, scoped, tag = 'scoped memory for tpu_custom_call.1']
    #allocation5 [shape = 'u8[8192]{0}', space=vmem, size = 0x2000, scoped, tag = 'input window, operand 1, single buffered']
    #allocation6 [shape = 's32[1]{0}', space=sflag, size = 0x4, scoped, tag = 'scoped memory for tpu_custom_call.1']
    #allocation7 [shape = 'u8[32768]{0}', space=vmem, size = 0x8000, scoped, tag = 'input window, operand 3, single buffered']
    #allocation8 [shape = 'u8[8192]{0}', space=vmem, size = 0x2000, scoped, tag = 'output window, operand 0, single buffered']
    %10 = vsyncpa [#allocation3], 0
    %11 = vsyncpa [#allocation6], 0
    %12 = vsyncpa [#allocation4], 0
    // Predicated region
    $region2: #{tpu_custom_call.1} parent=1 // pred_check
      _
    $region3: #{tpu_custom_call.1} parent=1 // pred_check_branch
      %14 = sbr.rel (0) target = $region5
    $region4: #{tpu_custom_call.1} parent=1 // pred_region
      %s16 = ssub.s32 128, 128
      %17 = vsyncadd [#allocation3], %s16
      %s18 = sshll.u32 [#allocation2], 4
      %s19 = int_to_ptr.vmem [resolvable:$true] %s18
      %24 = dma.hbm_to_vmem [thread:$0]  %s0, 128, %s19, [#allocation3], 64, 64, 4
    $region5: #{tpu_custom_call.1} parent=1 // pred_fallthru
      _
    // Predicated region
    $region6: #{tpu_custom_call.1} parent=1 // pred_check
      _
    $region7: #{tpu_custom_call.1} parent=1 // pred_check_branch
      %26 = sbr.rel (0) target = $region9
    $region8: #{tpu_custom_call.1} parent=1 // pred_region
      %s28 = ssub.s32 256, 256
      %29 = vsyncadd [#allocation6], %s28
      %s30 = sshll.u32 [#allocation5], 4
      %s31 = int_to_ptr.vmem [resolvable:$true] %s30
      %36 = dma.hbm_to_vmem [thread:$0]  %s1, 256, %s31, [#allocation6], 64, 64, 4
    $region9: #{tpu_custom_call.1} parent=1 // pred_fallthru
      _
    // Predicated region
    $region10: #{tpu_custom_call.1} parent=1 // pred_check
      _
    $region11: #{tpu_custom_call.1} parent=1 // pred_check_branch
      %38 = sbr.rel (0) target = $region13
    $region12: #{tpu_custom_call.1} parent=1 // pred_region
      _
    $region13: #{tpu_custom_call.1} parent=1 // pred_fallthru
      _
    // Predicated region
    $region14: #{tpu_custom_call.1} parent=1 // pred_check
      _
    $region15: #{tpu_custom_call.1} parent=1 // pred_check_branch
      %40 = sbr.rel (0) target = $region17
    $region16: #{tpu_custom_call.1} parent=1 // pred_region
      %s42 = ssub.s32 1024, 1024
      %43 = vsyncadd [#allocation6], %s42
      %s44 = sshll.u32 [#allocation7], 4
      %s45 = int_to_ptr.vmem [resolvable:$true] %s44
      %50 = dma.hbm_to_vmem [thread:$0]  %s3, 1024, %s45, [#allocation6], 64, 64, 4
    $region17: #{tpu_custom_call.1} parent=1 // pred_fallthru
      _
    // Predicated region
    $region18: #{tpu_custom_call.1} parent=1 // pred_check
      _
    $region19: #{tpu_custom_call.1} parent=1 // pred_check_branch
      %52 = sbr.rel (0) target = $region21
    $region20: #{tpu_custom_call.1} parent=1 // pred_region
      _
    $region21: #{tpu_custom_call.1} parent=1 // pred_fallthru
      _
    // Predicated region
    $region22: #{tpu_custom_call.1} parent=1 // pred_check
      _
    $region23: #{tpu_custom_call.1} parent=1 // pred_check_branch
      %54 = sbr.rel (0) target = $region25
    $region24: #{tpu_custom_call.1} parent=1 // pred_region
      %55 = dma.done [#allocation3], 128
    $region25: #{tpu_custom_call.1} parent=1 // pred_fallthru
      _
    // Predicated region
    $region26: #{tpu_custom_call.1} parent=1 // pred_check
      _
    $region27: #{tpu_custom_call.1} parent=1 // pred_check_branch
      %57 = sbr.rel (0) target = $region29
    $region28: #{tpu_custom_call.1} parent=1 // pred_region
      %58 = dma.done [#allocation6], 256
    $region29: #{tpu_custom_call.1} parent=1 // pred_fallthru
      _
    // Predicated region
    $region30: #{tpu_custom_call.1} parent=1 // pred_check
      _
    $region31: #{tpu_custom_call.1} parent=1 // pred_check_branch
      %60 = sbr.rel (0) target = $region33
    $region32: #{tpu_custom_call.1} parent=1 // pred_region
      %61 = dma.done [#allocation6], 1024
    $region33: #{tpu_custom_call.1} parent=1 // pred_fallthru
      _
    %p63 = scmp.eq.s32.totalorder 0, 0
    // Predicated region
    $region34: #{tpu_custom_call.1} parent=1 // pred_check
      %p64 = pneg %p63
    $region35: #{tpu_custom_call.1} parent=1 // pred_check_branch
      %66 = sbr.rel (%p64) target = $region37
    $region36: #{tpu_custom_call.1} parent=1 // pred_region
      %v67 = vld [vmem:[%s4] sm:$0x1]
      %v69 = vlaneseq
      %v70 = vshrl.u32 %v69, 7
      %v71 = vsub.s32 0, %v70
      %v72 = vrot.slane %v67, %v71
      %74 = vst [vmem:[#allocation8] sm:$0xff] %v72
      %75 = vst [vmem:[#allocation8 + $0x8] sm:$0xff] %v72
    $region37: #{tpu_custom_call.1} parent=1 // pred_fallthru
      _
    %v76 = vld [vmem:[#allocation2] sm:$0xf]
    %v77 = vld [vmem:[#allocation2 + $0x4] sm:$0xf]
    %v78 = vld [vmem:[#allocation5] sm:$0xf]
    %v79 = vld [vmem:[#allocation5 + $0x4] sm:$0xf]
    %v80 = vld [vmem:[#allocation5 + $0x8] sm:$0xf]
    %v81 = vld [vmem:[#allocation5 + $0xc] sm:$0xf]
    %v82 = vld [vmem:[%s2] sm:$0x1]
    %v84 = vlaneseq
    %v85 = vshrl.u32 %v84, 7
    %v86 = vsub.s32 0, %v85
    %v87 = vrot.slane %v82, %v86
    %v91 = vunpack.c.l.b16 %v76
    %v92 = vunpack.c.l.b16 %v77
    %v93 = vpack.c.b16 %v92, %v91
    %v98 = vunpack.c.l.b16 %v78
    %v99 = vunpack.c.l.b16 %v79
    %v100 = vunpack.c.l.b16 %v80
    %v101 = vunpack.c.l.b16 %v81
    %v102 = vpack.c.b16 %v99, %v98
    %v103 = vpack.c.b16 %v101, %v100
    %vm106 = vcmask 261120
    %v108 = vsel %vm106, %v93, 0
    %110 = vmatprep.subr.bf16.mxu0 0
    %111 = vmatpush1.bf16.msra.mxu0 %v102
    %112 = vmatprep.subr.bf16.mxu0 0
    %113 = vmatpush1.bf16.msra.mxu0 %v103
    %114 = vmatprep.subr.bf16.mxu0 0
    %115 = vmatpush1.bf16.msra.mxu0 0
    %116 = vmatprep.subr.bf16.mxu0 0
    %117 = vmatpush1.bf16.msra.mxu0 0
    %118 = vmatprep.subr.bf16.mxu0 0
    %119 = vmatpush1.bf16.msra.mxu0 0
    %120 = vmatprep.subr.bf16.mxu0 0
    %121 = vmatpush1.bf16.msra.mxu0 0
    %122 = vmatprep.subr.bf16.mxu0 0
    %123 = vmatpush1.bf16.msra.mxu0 0
    %124 = vmatprep.subr.bf16.mxu0 0
    %125 = vmatpush1.bf16.msra.mxu0 0
    %126 = vmatprep.subr.bf16.mxu0 0
    %127 = vmatpush1.bf16.msra.mxu0 0
    %128 = vmatprep.subr.bf16.mxu0 0
    %129 = vmatpush1.bf16.msra.mxu0 0
    %130 = vmatprep.subr.bf16.mxu0 0
    %131 = vmatpush1.bf16.msra.mxu0 0
    %132 = vmatprep.subr.bf16.mxu0 0
    %133 = vmatpush1.bf16.msra.mxu0 0
    %134 = vmatprep.subr.bf16.mxu0 0
    %135 = vmatpush1.bf16.msra.mxu0 0
    %136 = vmatprep.subr.bf16.mxu0 0
    %137 = vmatpush1.bf16.msra.mxu0 0
    %138 = vmatprep.subr.bf16.mxu0 0
    %139 = vmatpush1.bf16.msra.mxu0 0
    %140 = vmatprep.subr.bf16.mxu0 0
    %141 = vmatpush1.bf16.msra.mxu0 0
    %142 = vmatprep.mubr.bf16.mxu0 0
    %143 = vmatmul.mubr.bf16.gmra.mrb[0].mxu0 %v108
    %v144 = vpop.f32.mrb[0].mxu0
    %v145 = vadd.f32 %v87, %v144
    %v146 = vpop.f32.mrb[0].mxu0
    %v147 = vpop.f32.mrb[0].mxu0
    %v148 = vadd.f32 %v87, %v147
    %v149 = vpop.f32.mrb[0].mxu0
    %150 = vdwg.mxu0
    %v151 = vmul.f32 %v145, 0.5
    %v152 = vmul.f32 %v148, 0.5
    %v153 = vmul.f32 %v145, 0.044715
    %v154 = vmul.f32 %v148, 0.044715
    %v155 = vmul.f32 %v153, %v145
    %v156 = vmul.f32 %v154, %v148
    %v157 = vmul.f32 %v155, %v145
    %v158 = vmul.f32 %v156, %v148
    %v159 = vadd.f32 %v145, %v157
    %v160 = vadd.f32 %v148, %v158
    %v161 = vmul.f32 %v159, 0.7978846
    %v162 = vmul.f32 %v160, 0.7978846
    %v163 = vtanh.pop %v161
    %v164 = vtanh.pop %v162
    %v165 = vadd.f32 %v163, 1.0
    %v166 = vadd.f32 %v164, 1.0
    %v167 = vmul.f32 %v151, %v165
    %v168 = vmul.f32 %v152, %v166
    %v169 = vld [vmem:[#allocation8] sm:$0xff]
    %v170 = vld [vmem:[#allocation8 + $0x8] sm:$0xff]
    %v171 = vpack.c.bf16 %v168, %v167
    %v172 = vld [vmem:[#allocation7] sm:$0xf]
    %v173 = vld [vmem:[#allocation7 + $0x4] sm:$0xf]
    %v174 = vld [vmem:[#allocation7 + $0x8] sm:$0xf]
    %v175 = vld [vmem:[#allocation7 + $0xc] sm:$0xf]
    %v176 = vld [vmem:[#allocation7 + $0x10] sm:$0xf]
    %v177 = vld [vmem:[#allocation7 + $0x14] sm:$0xf]
    %v178 = vld [vmem:[#allocation7 + $0x18] sm:$0xf]
    %v179 = vld [vmem:[#allocation7 + $0x1c] sm:$0xf]
    %v180 = vld [vmem:[#allocation7 + $0x20] sm:$0xf]
    %v181 = vld [vmem:[#allocation7 + $0x24] sm:$0xf]
    %v182 = vld [vmem:[#allocation7 + $0x28] sm:$0xf]
    %v183 = vld [vmem:[#allocation7 + $0x2c] sm:$0xf]
    %v184 = vld [vmem:[#allocation7 + $0x30] sm:$0xf]
    %v185 = vld [vmem:[#allocation7 + $0x34] sm:$0xf]
    %v186 = vld [vmem:[#allocation7 + $0x38] sm:$0xf]
    %v187 = vld [vmem:[#allocation7 + $0x3c] sm:$0xf]
    %v204 = vunpack.c.l.b16 %v172
    %v205 = vunpack.c.l.b16 %v173
    %v206 = vunpack.c.l.b16 %v174
    %v207 = vunpack.c.l.b16 %v175
    %v208 = vunpack.c.l.b16 %v176
    %v209 = vunpack.c.l.b16 %v177
    %v210 = vunpack.c.l.b16 %v178
    %v211 = vunpack.c.l.b16 %v179
    %v212 = vunpack.c.l.b16 %v180
    %v213 = vunpack.c.l.b16 %v181
    %v214 = vunpack.c.l.b16 %v182
    %v215 = vunpack.c.l.b16 %v183
    %v216 = vunpack.c.l.b16 %v184
    %v217 = vunpack.c.l.b16 %v185
    %v218 = vunpack.c.l.b16 %v186
    %v219 = vunpack.c.l.b16 %v187
    %v220 = vpack.c.b16 %v205, %v204
    %v221 = vpack.c.b16 %v207, %v206
    %v222 = vpack.c.b16 %v209, %v208
    %v223 = vpack.c.b16 %v211, %v210
    %v224 = vpack.c.b16 %v213, %v212
    %v225 = vpack.c.b16 %v215, %v214
    %v226 = vpack.c.b16 %v217, %v216
    %v227 = vpack.c.b16 %v219, %v218
    %236 = vmatprep.subr.bf16.mxu0 0
    %237 = vmatpush1.bf16.msra.mxu0 %v220
    %238 = vmatprep.subr.bf16.mxu0 0
    %239 = vmatpush1.bf16.msra.mxu0 %v221
    %240 = vmatprep.subr.bf16.mxu0 0
    %241 = vmatpush1.bf16.msra.mxu0 %v222
    %242 = vmatprep.subr.bf16.mxu0 0
    %243 = vmatpush1.bf16.msra.mxu0 %v223
    %244 = vmatprep.subr.bf16.mxu0 0
    %245 = vmatpush1.bf16.msra.mxu0 %v224
    %246 = vmatprep.subr.bf16.mxu0 0
    %247 = vmatpush1.bf16.msra.mxu0 %v225
    %248 = vmatprep.subr.bf16.mxu0 0
    %249 = vmatpush1.bf16.msra.mxu0 %v226
    %250 = vmatprep.subr.bf16.mxu0 0
    %251 = vmatpush1.bf16.msra.mxu0 %v227
    %252 = vmatprep.subr.bf16.mxu0 0
    %253 = vmatpush1.bf16.msra.mxu0 0
    %254 = vmatprep.subr.bf16.mxu0 0
    %255 = vmatpush1.bf16.msra.mxu0 0
    %256 = vmatprep.subr.bf16.mxu0 0
    %257 = vmatpush1.bf16.msra.mxu0 0
    %258 = vmatprep.subr.bf16.mxu0 0
    %259 = vmatpush1.bf16.msra.mxu0 0
    %260 = vmatprep.subr.bf16.mxu0 0
    %261 = vmatpush1.bf16.msra.mxu0 0
    %262 = vmatprep.subr.bf16.mxu0 0
    %263 = vmatpush1.bf16.msra.mxu0 0
    %264 = vmatprep.subr.bf16.mxu0 0
    %265 = vmatpush1.bf16.msra.mxu0 0
    %266 = vmatprep.subr.bf16.mxu0 0
    %267 = vmatpush1.bf16.msra.mxu0 0
    %268 = vmatprep.mubr.bf16.mxu0 0
    %269 = vmatmul.mubr.bf16.gmra.mrb[0].mxu0 %v171
    %v270 = vpop.f32.mrb[0].mxu0
    %v271 = vadd.f32 0.0, %v270
    %v272 = vpop.f32.mrb[0].mxu0
    %v273 = vpop.f32.mrb[0].mxu0
    %v274 = vadd.f32 0.0, %v273
    %v275 = vpop.f32.mrb[0].mxu0
    %276 = vdwg.mxu0
    %v277 = vadd.f32 %v169, %v271
    %v278 = vadd.f32 %v170, %v274
    %279 = vst [vmem:[#allocation8] sm:$0xff] %v277
    %280 = vst [vmem:[#allocation8 + $0x8] sm:$0xff] %v278
    // Predicated region
    $region38: #{tpu_custom_call.1} parent=1 // pred_check
      _
    $region39: #{tpu_custom_call.1} parent=1 // pred_check_branch
      %282 = sbr.rel (0) target = $region41
    $region40: #{tpu_custom_call.1} parent=1 // pred_region
      %s284 = ssub.s32 256, 256
      %285 = vsyncadd [#allocation4], %s284
      %s286 = sshll.u32 [#allocation8], 4
      %s287 = int_to_ptr.vmem [resolvable:$true] %s286
      %292 = dma.vmem_to_hbm [thread:$0]  %s287, 256, %s5, [#allocation4], 128, 128, 8
    $region41: #{tpu_custom_call.1} parent=1 // pred_fallthru
      _
    // Predicated region
    $region42: #{tpu_custom_call.1} parent=1 // pred_check
      _
    $region43: #{tpu_custom_call.1} parent=1 // pred_check_branch
      %294 = sbr.rel (0) target = $region45
    $region44: #{tpu_custom_call.1} parent=1 // pred_region
      %295 = dma.done [#allocation4], 256
    $region45: #{tpu_custom_call.1} parent=1 // pred_fallthru
      _
    %296 = vsyncpa [#allocation3], 1
    %297 = vsyncpa [#allocation6], 1
    %298 = vsyncpa [#allocation4], 1

</llo_original>
